<compile_context>
chip_gen: v7x
topology: tpu7x:2x2x1
jax: 0.10.0
libtpu: 0.0.40
codegen_flags: <defaults>
</compile_context>

<pallas_src>
import math

import jax
import jax.numpy as jnp
from jax.experimental import pallas as pl
from jax.experimental.pallas import tpu as pltpu

# ---- model hyper-parameters (small, consistent with the module) -------------
B = 2          # batch
T = 8          # sequence length
C = 32         # embed_dim
NH = 4         # num_heads
HD = C // NH   # head_dim
N = B * T      # folded (batch * seq) rows
EPS = 1e-5     # nn.LayerNorm default
NEG_INF = -1e30
LANES = 128    # lane-padded width of the packed slabs


def _layernorm(h, g, b):
    mu = jnp.mean(h, axis=-1, keepdims=True)
    var = jnp.mean((h - mu) * (h - mu), axis=-1, keepdims=True)
    return (h - mu) * jax.lax.rsqrt(var + EPS) * g + b


def _gelu_tanh(x):
    # GELU(approximate='tanh')
    c = math.sqrt(2.0 / math.pi)
    return 0.5 * x * (1.0 + jnp.tanh(c * (x + 0.044715 * x * x * x)))


def block_kernel(x_ref, w_ref, vec_ref, mask_ref, hmask_ref, out_ref):
    f32 = jnp.float32
    bf16 = jnp.bfloat16

    x = x_ref[...]                                   # (N, C) f32
    vecs = vec_ref[...]                              # (8, 128) f32 (one vreg)

    ln1g = vecs[0:1, :C]
    ln1b = vecs[1:2, :C]
    ln2g = vecs[2:3, :C]
    ln2b = vecs[3:4, :C]
    bqkv = vecs[4:5, :]                              # (1, 128), q-part pre-scaled
    bo = vecs[5:6, :C]
    b1 = vecs[6:7, :]                                # (1, 128)
    b2 = vecs[7:8, :C]

    # ---------------- ln1 + causal self-attention ----------------
    h = _layernorm(x, ln1g, ln1b)                    # (N, C) f32

    # fused, lane-dense QKV projection (q columns pre-scaled by 1/sqrt(HD))
    wqkv = w_ref[0:C, :]                             # (C, 128) bf16
    qkv = jnp.dot(h.astype(bf16), wqkv,
                  preferred_element_type=f32) + bqkv  # (N, 128)
    q = qkv[:, 0 * C:1 * C]                          # (N, C)
    k = qkv[:, 1 * C:2 * C]
    v = qkv[:, 2 * C:3 * C]

    # per-head scores via one flat matmul: rows h*N+i hold head-h-masked q[i]
    hmask = hmask_ref[...]                           # (NH*N, C) f32 0/1
    q_rep = jnp.concatenate([q] * NH, axis=0)        # (NH*N, C) sublane concat
    qm = (q_rep * hmask).astype(bf16)                # (NH*N, C)
    k_bf = k.astype(bf16)
    v_bf = v.astype(bf16)

    # s[h*N+i, j] = sum_{d in head h} q[i,d] * k[j,d]
    s = jax.lax.dot_general(qm, k_bf, (((1,), (1,)), ((), ())),
                            preferred_element_type=f32)   # (NH*N, N)
    s = s + mask_ref[...]                            # block-diag causal bias

    m = jnp.max(s, axis=-1, keepdims=True)
    p = jnp.exp(s - m)
    p = p * pl.reciprocal(jnp.sum(p, axis=-1, keepdims=True), approx=True)

    # context: one flat matmul, then head lanes selected by mask and summed
    pv = jnp.dot(p.astype(bf16), v_bf,
                 preferred_element_type=f32)          # (NH*N, C)
    pm = pv * hmask
    y = pm[0:N]
    for hh in range(1, NH):
        y = y + pm[hh * N:(hh + 1) * N]               # (N, C)

    wo = w_ref[C:2 * C, :C]                           # (C, C) bf16
    attn_out = jnp.dot(y.astype(bf16), wo,
                       preferred_element_type=f32) + bo
    # TODO(synk): attn/resid dropout omitted (eval mode -> identity)

    x = x + attn_out                                  # residual 1

    # ---------------- ln2 + MLP ----------------
    h2 = _layernorm(x, ln2g, ln2b)
    w1 = w_ref[2 * C:3 * C, :]                        # (C, 4C) bf16 lane-dense
    mlp = jnp.dot(h2.astype(bf16), w1,
                  preferred_element_type=f32) + b1    # (N, 4C)
    mlp = _gelu_tanh(mlp)
    w2 = w_ref[3 * C:3 * C + 4 * C, :C]               # (4C, C) bf16
    mlp = jnp.dot(mlp.astype(bf16), w2,
                  preferred_element_type=f32) + b2    # (N, C)

    out_ref[...] = (x + mlp).astype(out_ref.dtype)    # residual 2


def pack_params(params):
    """One-time packing (outside the per-call path): fuse QKV, fold the softmax
    scale into Q, cast weights to bf16, build slabs + masks."""
    (ln1g, ln1b, wq, bq, wk, bk, wv, bv, wo, bo,
     ln2g, ln2b, w1, b1, w2, b2) = params
    scale = 1.0 / math.sqrt(HD)

    # bf16 weight slab: rows [0:C]=wqkv, [C:2C]=wo, [2C:3C]=w1, [3C:7C]=w2
    wslab = jnp.zeros((7 * C, LANES), jnp.float32)
    wqkv = jnp.concatenate([wq * scale, wk, wv], axis=1)          # (C, 3C)
    wslab = wslab.at[0:C, 0:3 * C].set(wqkv)
    wslab = wslab.at[C:2 * C, 0:C].set(wo)
    wslab = wslab.at[2 * C:3 * C, 0:4 * C].set(w1)
    wslab = wslab.at[3 * C:7 * C, 0:C].set(w2)
    wslab = wslab.astype(jnp.bfloat16)

    # f32 small-vector slab (8, 128): LN params + biases
    vslab = jnp.zeros((8, LANES), jnp.float32)
    vslab = vslab.at[0, 0:C].set(ln1g[0])
    vslab = vslab.at[1, 0:C].set(ln1b[0])
    vslab = vslab.at[2, 0:C].set(ln2g[0])
    vslab = vslab.at[3, 0:C].set(ln2b[0])
    bqkv = jnp.concatenate([bq * scale, bk, bv], axis=1)          # (1, 3C)
    vslab = vslab.at[4, 0:3 * C].set(bqkv[0])
    vslab = vslab.at[5, 0:C].set(bo[0])
    vslab = vslab.at[6, 0:4 * C].set(b1[0])
    vslab = vslab.at[7, 0:C].set(b2[0])

    # block-diagonal causal additive bias over the folded (B*T) axis,
    # tiled once per head along rows -> (NH*N, N)
    idx = jnp.arange(N)
    bi, ti = idx // T, idx % T
    allowed = (bi[:, None] == bi[None, :]) & (ti[None, :] <= ti[:, None])
    mask = jnp.where(allowed, 0.0, NEG_INF).astype(jnp.float32)   # (N, N)
    maskf = jnp.tile(mask, (NH, 1))                               # (NH*N, N)

    # per-row head lane mask: row h*N+i keeps lanes of head h -> (NH*N, C)
    head_of_lane = jnp.arange(C) // HD
    hmask = (head_of_lane[None, :] == jnp.arange(NH)[:, None]).astype(jnp.float32)
    hmaskf = jnp.repeat(hmask, N, axis=0)                         # (NH*N, C)

    return (jax.device_put(wslab), jax.device_put(vslab),
            jax.device_put(maskf), jax.device_put(hmaskf))


def _transformer_block(x, wslab, vslab, maskf, hmaskf):
    """x: (B, T, C) float32 -> (B, T, C) float32"""
    x_flat = x.reshape(N, C)
    vmem = lambda: pl.BlockSpec(memory_space=pltpu.MemorySpace.VMEM)
    out = pl.pallas_call(
        block_kernel,
        out_shape=jax.ShapeDtypeStruct((N, C), jnp.float32),
        in_specs=[vmem(), vmem(), vmem(), vmem(), vmem()],
        out_specs=vmem(),
    )(x_flat, wslab, vslab, maskf, hmaskf)
    return out.reshape(B, T, C)


transformer_block = jax.jit(_transformer_block)


def reference_block(x, params):
    """Pure-JAX f32 reference matching the PyTorch eval-mode forward."""
    (ln1g, ln1b, wq, bq, wk, bk, wv, bv, wo, bo,
     ln2g, ln2b, w1, b1, w2, b2) = params

    def ln(h, g, b):
        mu = jnp.mean(h, axis=-1, keepdims=True)
        var = jnp.mean((h - mu) ** 2, axis=-1, keepdims=True)
        return (h - mu) / jnp.sqrt(var + EPS) * g + b

    h = ln(x, ln1g, ln1b)
    q = h @ wq + bq
    k = h @ wk + bk
    v = h @ wv + bv
    qh = q.reshape(B, T, NH, HD).transpose(0, 2, 1, 3)
    kh = k.reshape(B, T, NH, HD).transpose(0, 2, 1, 3)
    vh = v.reshape(B, T, NH, HD).transpose(0, 2, 1, 3)
    s = jnp.einsum('bhqd,bhkd->bhqk', qh, kh) / math.sqrt(HD)
    causal = jnp.tril(jnp.ones((T, T), bool))
    s = jnp.where(causal[None, None], s, -jnp.inf)
    p = jax.nn.softmax(s, axis=-1)
    y = jnp.einsum('bhqk,bhkd->bhqd', p, vh).transpose(0, 2, 1, 3).reshape(B, T, C)
    x = x + (y @ wo + bo)
    h2 = ln(x, ln2g, ln2b)
    m = jax.nn.gelu(h2 @ w1 + b1, approximate=True)
    m = m @ w2 + b2
    return x + m


def init_params(key):
    ks = jax.random.split(key, 8)
    s = 0.02
    ln1g = jnp.ones((1, C), jnp.float32)
    ln1b = jnp.zeros((1, C), jnp.float32)
    ln2g = jnp.ones((1, C), jnp.float32)
    ln2b = jnp.zeros((1, C), jnp.float32)
    wq = s * jax.random.normal(ks[0], (C, C), jnp.float32)
    wk = s * jax.random.normal(ks[1], (C, C), jnp.float32)
    wv = s * jax.random.normal(ks[2], (C, C), jnp.float32)
    wo = s * jax.random.normal(ks[3], (C, C), jnp.float32)
    bq = s * jax.random.normal(ks[4], (1, C), jnp.float32)
    bk = jnp.zeros((1, C), jnp.float32)
    bv = jnp.zeros((1, C), jnp.float32)
    bo = jnp.zeros((1, C), jnp.float32)
    w1 = s * jax.random.normal(ks[5], (C, 4 * C), jnp.float32)
    b1 = s * jax.random.normal(ks[6], (1, 4 * C), jnp.float32)
    w2 = s * jax.random.normal(ks[7], (4 * C, C), jnp.float32)
    b2 = jnp.zeros((1, C), jnp.float32)
    return (ln1g, ln1b, wq, bq, wk, bk, wv, bv, wo, bo,
            ln2g, ln2b, w1, b1, w2, b2)


if __name__ == "__main__":
    key = jax.random.PRNGKey(0)
    kx, kp = jax.random.split(key)
    x = jax.random.normal(kx, (B, T, C), jnp.float32)
    params = init_params(kp)

    packed = pack_params(params)          # one-time packing, outside per-call jit

    out = transformer_block(x, *packed)
    out = jax.block_until_ready(out)
    assert out.shape == (B, T, C) and out.dtype == jnp.float32
    assert bool(jnp.all(jnp.isfinite(out)))

    ref = reference_block(x, params)
    max_err = float(jnp.max(jnp.abs(out - ref)))
    assert max_err < 5e-2, f"kernel vs reference mismatch: {max_err}"

    print("KERNEL_OK")
</pallas_src>

<mosaic_0001>
module attributes {stable_mosaic.version = 11 : i64} {
  func.func @block_kernel(%arg0: memref<16x32xf32, #tpu.memory_space<vmem>>, %arg1: memref<224x128xbf16, #tpu.memory_space<vmem>>, %arg2: memref<8x128xf32, #tpu.memory_space<vmem>>, %arg3: memref<64x16xf32, #tpu.memory_space<vmem>>, %arg4: memref<64x32xf32, #tpu.memory_space<vmem>>, %arg5: memref<16x32xf32, #tpu.memory_space<vmem>>) attributes {dimension_semantics = [], scalar_prefetch = 0 : i64, scratch_operands = 0 : i64, tpu.core_type = #tpu.core_type<tc>} {
    %c0 = arith.constant 0 : index
    %c0_0 = arith.constant 0 : index
    %0 = vector.load %arg0[%c0, %c0_0] : memref<16x32xf32, #tpu.memory_space<vmem>>, vector<16x32xf32>
    %c0_1 = arith.constant 0 : index
    %c0_2 = arith.constant 0 : index
    %1 = vector.load %arg2[%c0_1, %c0_2] : memref<8x128xf32, #tpu.memory_space<vmem>>, vector<8x128xf32>
    %2 = vector.extract_strided_slice %1 {offsets = [0, 0], sizes = [1, 32], strides = [1, 1]} : vector<8x128xf32> to vector<1x32xf32>
    %3 = vector.extract_strided_slice %1 {offsets = [1, 0], sizes = [1, 32], strides = [1, 1]} : vector<8x128xf32> to vector<1x32xf32>
    %4 = vector.extract_strided_slice %1 {offsets = [2, 0], sizes = [1, 32], strides = [1, 1]} : vector<8x128xf32> to vector<1x32xf32>
    %5 = vector.extract_strided_slice %1 {offsets = [3, 0], sizes = [1, 32], strides = [1, 1]} : vector<8x128xf32> to vector<1x32xf32>
    %6 = vector.extract_strided_slice %1 {offsets = [4, 0], sizes = [1, 128], strides = [1, 1]} : vector<8x128xf32> to vector<1x128xf32>
    %7 = vector.extract_strided_slice %1 {offsets = [5, 0], sizes = [1, 32], strides = [1, 1]} : vector<8x128xf32> to vector<1x32xf32>
    %8 = vector.extract_strided_slice %1 {offsets = [6, 0], sizes = [1, 128], strides = [1, 1]} : vector<8x128xf32> to vector<1x128xf32>
    %9 = vector.extract_strided_slice %1 {offsets = [7, 0], sizes = [1, 32], strides = [1, 1]} : vector<8x128xf32> to vector<1x32xf32>
    %cst = arith.constant dense<0.000000e+00> : vector<16xf32>
    %10 = vector.multi_reduction <add>, %0, %cst [1] : vector<16x32xf32> to vector<16xf32>
    %11 = vector.shape_cast %10 : vector<16xf32> to vector<16x1xf32>
    %cst_3 = arith.constant 3.200000e+01 : f32
    %12 = vector.broadcast %cst_3 : f32 to vector<16x1xf32>
    %13 = arith.divf %11, %12 : vector<16x1xf32>
    %14 = vector.broadcast %13 : vector<16x1xf32> to vector<16x32xf32>
    %15 = arith.subf %0, %14 : vector<16x32xf32>
    %16 = vector.broadcast %13 : vector<16x1xf32> to vector<16x32xf32>
    %17 = arith.subf %0, %16 : vector<16x32xf32>
    %18 = arith.mulf %15, %17 : vector<16x32xf32>
    %cst_4 = arith.constant dense<0.000000e+00> : vector<16xf32>
    %19 = vector.multi_reduction <add>, %18, %cst_4 [1] : vector<16x32xf32> to vector<16xf32>
    %20 = vector.shape_cast %19 : vector<16xf32> to vector<16x1xf32>
    %cst_5 = arith.constant 3.200000e+01 : f32
    %21 = vector.broadcast %cst_5 : f32 to vector<16x1xf32>
    %22 = arith.divf %20, %21 : vector<16x1xf32>
    %23 = vector.broadcast %13 : vector<16x1xf32> to vector<16x32xf32>
    %24 = arith.subf %0, %23 : vector<16x32xf32>
    %cst_6 = arith.constant 9.99999974E-6 : f32
    %25 = vector.broadcast %cst_6 : f32 to vector<16x1xf32>
    %26 = arith.addf %22, %25 : vector<16x1xf32>
    %27 = math.rsqrt %26 : vector<16x1xf32>
    %28 = vector.broadcast %27 : vector<16x1xf32> to vector<16x32xf32>
    %29 = arith.mulf %24, %28 : vector<16x32xf32>
    %30 = vector.broadcast %2 : vector<1x32xf32> to vector<16x32xf32>
    %31 = arith.mulf %29, %30 : vector<16x32xf32>
    %32 = vector.broadcast %3 : vector<1x32xf32> to vector<16x32xf32>
    %33 = arith.addf %31, %32 : vector<16x32xf32>
    %c0_7 = arith.constant 0 : index
    %c0_8 = arith.constant 0 : index
    %34 = vector.load %arg1[%c0_7, %c0_8] : memref<224x128xbf16, #tpu.memory_space<vmem>>, vector<32x128xbf16>
    %35 = arith.truncf %33 : vector<16x32xf32> to vector<16x32xbf16>
    %cst_9 = arith.constant dense<0.000000e+00> : vector<16x128xf32>
    %36 = tpu.matmul %35, %34, %cst_9 {dimension_numbers = #tpu.dot_dimension_numbers<[1], [0], [0], [1], [0, 0, 1, 1], [], []>} : vector<16x32xbf16>, vector<32x128xbf16>, vector<16x128xf32> -> vector<16x128xf32>
    %37 = vector.broadcast %6 : vector<1x128xf32> to vector<16x128xf32>
    %38 = arith.addf %36, %37 : vector<16x128xf32>
    %39 = vector.extract_strided_slice %38 {offsets = [0, 0], sizes = [16, 32], strides = [1, 1]} : vector<16x128xf32> to vector<16x32xf32>
    %40 = vector.extract_strided_slice %38 {offsets = [0, 32], sizes = [16, 32], strides = [1, 1]} : vector<16x128xf32> to vector<16x32xf32>
    %41 = vector.extract_strided_slice %38 {offsets = [0, 64], sizes = [16, 32], strides = [1, 1]} : vector<16x128xf32> to vector<16x32xf32>
    %c0_10 = arith.constant 0 : index
    %c0_11 = arith.constant 0 : index
    %42 = vector.load %arg4[%c0_10, %c0_11] : memref<64x32xf32, #tpu.memory_space<vmem>>, vector<64x32xf32>
    %43 = tpu.concatenate %39, %39, %39, %39 in 0 : vector<16x32xf32>, vector<16x32xf32>, vector<16x32xf32>, vector<16x32xf32> -> vector<64x32xf32>
    %44 = arith.mulf %43, %42 : vector<64x32xf32>
    %45 = arith.truncf %44 : vector<64x32xf32> to vector<64x32xbf16>
    %46 = arith.truncf %40 : vector<16x32xf32> to vector<16x32xbf16>
    %47 = arith.truncf %41 : vector<16x32xf32> to vector<16x32xbf16>
    %cst_12 = arith.constant dense<0.000000e+00> : vector<64x16xf32>
    %48 = tpu.matmul %45, %46, %cst_12 {dimension_numbers = #tpu.dot_dimension_numbers<[1], [1], [0], [0], [0, 0, 1, 0], [], []>} : vector<64x32xbf16>, vector<16x32xbf16>, vector<64x16xf32> -> vector<64x16xf32>
    %c0_13 = arith.constant 0 : index
    %c0_14 = arith.constant 0 : index
    %49 = vector.load %arg3[%c0_13, %c0_14] : memref<64x16xf32, #tpu.memory_space<vmem>>, vector<64x16xf32>
    %50 = arith.addf %48, %49 : vector<64x16xf32>
    %cst_15 = arith.constant dense<0xFF800000> : vector<64xf32>
    %51 = vector.multi_reduction <maximumf>, %50, %cst_15 [1] : vector<64x16xf32> to vector<64xf32>
    %52 = vector.shape_cast %51 : vector<64xf32> to vector<64x1xf32>
    %53 = vector.broadcast %52 : vector<64x1xf32> to vector<64x16xf32>
    %54 = arith.subf %50, %53 : vector<64x16xf32>
    %55 = math.exp %54 : vector<64x16xf32>
    %cst_16 = arith.constant dense<0.000000e+00> : vector<64xf32>
    %56 = vector.multi_reduction <add>, %55, %cst_16 [1] : vector<64x16xf32> to vector<64xf32>
    %57 = vector.shape_cast %56 : vector<64xf32> to vector<64x1xf32>
    %58 = tpu.reciprocal %57 {approx = true} : vector<64x1xf32> -> vector<64x1xf32>
    %59 = vector.broadcast %58 : vector<64x1xf32> to vector<64x16xf32>
    %60 = arith.mulf %55, %59 : vector<64x16xf32>
    %61 = arith.truncf %60 : vector<64x16xf32> to vector<64x16xbf16>
    %cst_17 = arith.constant dense<0.000000e+00> : vector<64x32xf32>
    %62 = tpu.matmul %61, %47, %cst_17 {dimension_numbers = #tpu.dot_dimension_numbers<[1], [0], [0], [1], [0, 0, 1, 1], [], []>} : vector<64x16xbf16>, vector<16x32xbf16>, vector<64x32xf32> -> vector<64x32xf32>
    %63 = arith.mulf %62, %42 : vector<64x32xf32>
    %64 = vector.extract_strided_slice %63 {offsets = [0, 0], sizes = [16, 32], strides = [1, 1]} : vector<64x32xf32> to vector<16x32xf32>
    %65 = vector.extract_strided_slice %63 {offsets = [16, 0], sizes = [16, 32], strides = [1, 1]} : vector<64x32xf32> to vector<16x32xf32>
    %66 = arith.addf %64, %65 : vector<16x32xf32>
    %67 = vector.extract_strided_slice %63 {offsets = [32, 0], sizes = [16, 32], strides = [1, 1]} : vector<64x32xf32> to vector<16x32xf32>
    %68 = arith.addf %66, %67 : vector<16x32xf32>
    %69 = vector.extract_strided_slice %63 {offsets = [48, 0], sizes = [16, 32], strides = [1, 1]} : vector<64x32xf32> to vector<16x32xf32>
    %70 = arith.addf %68, %69 : vector<16x32xf32>
    %c32 = arith.constant 32 : index
    %c0_18 = arith.constant 0 : index
    %71 = vector.load %arg1[%c32, %c0_18] : memref<224x128xbf16, #tpu.memory_space<vmem>>, vector<32x32xbf16>
    %72 = arith.truncf %70 : vector<16x32xf32> to vector<16x32xbf16>
    %cst_19 = arith.constant dense<0.000000e+00> : vector<16x32xf32>
    %73 = tpu.matmul %72, %71, %cst_19 {dimension_numbers = #tpu.dot_dimension_numbers<[1], [0], [0], [1], [0, 0, 1, 1], [], []>} : vector<16x32xbf16>, vector<32x32xbf16>, vector<16x32xf32> -> vector<16x32xf32>
    %74 = vector.broadcast %7 : vector<1x32xf32> to vector<16x32xf32>
    %75 = arith.addf %73, %74 : vector<16x32xf32>
    %76 = arith.addf %0, %75 : vector<16x32xf32>
    %cst_20 = arith.constant dense<0.000000e+00> : vector<16xf32>
    %77 = vector.multi_reduction <add>, %76, %cst_20 [1] : vector<16x32xf32> to vector<16xf32>
    %78 = vector.shape_cast %77 : vector<16xf32> to vector<16x1xf32>
    %cst_21 = arith.constant 3.200000e+01 : f32
    %79 = vector.broadcast %cst_21 : f32 to vector<16x1xf32>
    %80 = arith.divf %78, %79 : vector<16x1xf32>
    %81 = vector.broadcast %80 : vector<16x1xf32> to vector<16x32xf32>
    %82 = arith.subf %76, %81 : vector<16x32xf32>
    %83 = vector.broadcast %80 : vector<16x1xf32> to vector<16x32xf32>
    %84 = arith.subf %76, %83 : vector<16x32xf32>
    %85 = arith.mulf %82, %84 : vector<16x32xf32>
    %cst_22 = arith.constant dense<0.000000e+00> : vector<16xf32>
    %86 = vector.multi_reduction <add>, %85, %cst_22 [1] : vector<16x32xf32> to vector<16xf32>
    %87 = vector.shape_cast %86 : vector<16xf32> to vector<16x1xf32>
    %cst_23 = arith.constant 3.200000e+01 : f32
    %88 = vector.broadcast %cst_23 : f32 to vector<16x1xf32>
    %89 = arith.divf %87, %88 : vector<16x1xf32>
    %90 = vector.broadcast %80 : vector<16x1xf32> to vector<16x32xf32>
    %91 = arith.subf %76, %90 : vector<16x32xf32>
    %cst_24 = arith.constant 9.99999974E-6 : f32
    %92 = vector.broadcast %cst_24 : f32 to vector<16x1xf32>
    %93 = arith.addf %89, %92 : vector<16x1xf32>
    %94 = math.rsqrt %93 : vector<16x1xf32>
    %95 = vector.broadcast %94 : vector<16x1xf32> to vector<16x32xf32>
    %96 = arith.mulf %91, %95 : vector<16x32xf32>
    %97 = vector.broadcast %4 : vector<1x32xf32> to vector<16x32xf32>
    %98 = arith.mulf %96, %97 : vector<16x32xf32>
    %99 = vector.broadcast %5 : vector<1x32xf32> to vector<16x32xf32>
    %100 = arith.addf %98, %99 : vector<16x32xf32>
    %c64 = arith.constant 64 : index
    %c0_25 = arith.constant 0 : index
    %101 = vector.load %arg1[%c64, %c0_25] : memref<224x128xbf16, #tpu.memory_space<vmem>>, vector<32x128xbf16>
    %102 = arith.truncf %100 : vector<16x32xf32> to vector<16x32xbf16>
    %cst_26 = arith.constant dense<0.000000e+00> : vector<16x128xf32>
    %103 = tpu.matmul %102, %101, %cst_26 {dimension_numbers = #tpu.dot_dimension_numbers<[1], [0], [0], [1], [0, 0, 1, 1], [], []>} : vector<16x32xbf16>, vector<32x128xbf16>, vector<16x128xf32> -> vector<16x128xf32>
    %104 = vector.broadcast %8 : vector<1x128xf32> to vector<16x128xf32>
    %105 = arith.addf %103, %104 : vector<16x128xf32>
    %cst_27 = arith.constant 5.000000e-01 : f32
    %106 = vector.broadcast %cst_27 : f32 to vector<16x128xf32>
    %107 = arith.mulf %106, %105 : vector<16x128xf32>
    %cst_28 = arith.constant 4.471500e-02 : f32
    %108 = vector.broadcast %cst_28 : f32 to vector<16x128xf32>
    %109 = arith.mulf %108, %105 : vector<16x128xf32>
    %110 = arith.mulf %109, %105 : vector<16x128xf32>
    %111 = arith.mulf %110, %105 : vector<16x128xf32>
    %112 = arith.addf %105, %111 : vector<16x128xf32>
    %cst_29 = arith.constant 0.797884583 : f32
    %113 = vector.broadcast %cst_29 : f32 to vector<16x128xf32>
    %114 = arith.mulf %113, %112 : vector<16x128xf32>
    %115 = math.tanh %114 : vector<16x128xf32>
    %cst_30 = arith.constant 1.000000e+00 : f32
    %116 = vector.broadcast %cst_30 : f32 to vector<16x128xf32>
    %117 = arith.addf %116, %115 : vector<16x128xf32>
    %118 = arith.mulf %107, %117 : vector<16x128xf32>
    %c96 = arith.constant 96 : index
    %c0_31 = arith.constant 0 : index
    %119 = vector.load %arg1[%c96, %c0_31] : memref<224x128xbf16, #tpu.memory_space<vmem>>, vector<128x32xbf16>
    %120 = arith.truncf %118 : vector<16x128xf32> to vector<16x128xbf16>
    %cst_32 = arith.constant dense<0.000000e+00> : vector<16x32xf32>
    %121 = tpu.matmul %120, %119, %cst_32 {dimension_numbers = #tpu.dot_dimension_numbers<[1], [0], [0], [1], [0, 0, 1, 1], [], []>} : vector<16x128xbf16>, vector<128x32xbf16>, vector<16x32xf32> -> vector<16x32xf32>
    %122 = vector.broadcast %9 : vector<1x32xf32> to vector<16x32xf32>
    %123 = arith.addf %121, %122 : vector<16x32xf32>
    %124 = arith.addf %76, %123 : vector<16x32xf32>
    %c0_33 = arith.constant 0 : index
    %c0_34 = arith.constant 0 : index
    %125 = vector.load %arg5[%c0_33, %c0_34] : memref<16x32xf32, #tpu.memory_space<vmem>>, vector<16x32xf32>
    tpu.vector_store %arg5[%c0_33, %c0_34], %124 {strides = array<i32>} : memref<16x32xf32, #tpu.memory_space<vmem>>, vector<16x32xf32>,
    return
  }
}

</mosaic_0001>

<llo_original>
// kernel: _transformer_block.1
$region0: #{_transformer_block.1}
  #allocation0 [shape = 'u32[]', space=smem, size = 0x4, offset = 0x4, fixed_abs, tag = 'smem constant byte address 0x4 - core index']
  #allocation1 [shape = 'u32[144,128]{1,0:T(1,128)}', space=vmem, size = 0x12000, scoped, tag = 'internal scratch']
  %s0 = inlined_call_operand.vmem [shape: f32[16,32], index: 0, kind: input, shape index: {}]
  %s1 = inlined_call_operand.vmem [shape: bf16[224,128], index: 1, kind: input, shape index: {}]
  %s2 = inlined_call_operand.vmem [shape: f32[8,128], index: 2, kind: input, shape index: {}]
  %s3 = inlined_call_operand.vmem [shape: f32[64,16], index: 3, kind: input, shape index: {}]
  %s4 = inlined_call_operand.vmem [shape: f32[64,32], index: 4, kind: input, shape index: {}]
  %s5 = inlined_call_operand.hbm [shape: f32[16,32], index: 5, kind: output, shape index: {}]
  %s6 = sld [smem:[#allocation0]]
  $region30: #{_transformer_block.1} parent=0
    _
  %s8 = ssub.s32 1, %s6
  %s9 = scalar_select 0, %s8, %s6
  $region1: #{_transformer_block.1} parent=0
    #allocation2 [shape = 'u8[8192]{0}', space=vmem, size = 0x2000, scoped, tag = 'output window, operand 0, single buffered']
    #allocation3 [shape = 's32[1]{0}', space=sflag, size = 0x4, scoped, tag = 'scoped memory for _transformer_block.1']
    %10 = vsyncpa [#allocation3], 0
    // Predicated region
    $region2: #{_transformer_block.1} parent=1 // pred_check
      _
    $region3: #{_transformer_block.1} parent=1 // pred_check_branch
      %12 = sbr.rel (0) target = $region5
    $region4: #{_transformer_block.1} parent=1 // pred_region
      _
    $region5: #{_transformer_block.1} parent=1 // pred_fallthru
      _
    // Predicated region
    $region6: #{_transformer_block.1} parent=1 // pred_check
      _
    $region7: #{_transformer_block.1} parent=1 // pred_check_branch
      %14 = sbr.rel (0) target = $region9
    $region8: #{_transformer_block.1} parent=1 // pred_region
      _
    $region9: #{_transformer_block.1} parent=1 // pred_fallthru
      _
    // Predicated region
    $region10: #{_transformer_block.1} parent=1 // pred_check
      _
    $region11: #{_transformer_block.1} parent=1 // pred_check_branch
      %16 = sbr.rel (0) target = $region13
    $region12: #{_transformer_block.1} parent=1 // pred_region
      _
    $region13: #{_transformer_block.1} parent=1 // pred_fallthru
      _
    // Predicated region
    $region14: #{_transformer_block.1} parent=1 // pred_check
      _
    $region15: #{_transformer_block.1} parent=1 // pred_check_branch
      %18 = sbr.rel (0) target = $region17
    $region16: #{_transformer_block.1} parent=1 // pred_region
      _
    $region17: #{_transformer_block.1} parent=1 // pred_fallthru
      _
    // Predicated region
    $region18: #{_transformer_block.1} parent=1 // pred_check
      _
    $region19: #{_transformer_block.1} parent=1 // pred_check_branch
      %20 = sbr.rel (0) target = $region21
    $region20: #{_transformer_block.1} parent=1 // pred_region
      _
    $region21: #{_transformer_block.1} parent=1 // pred_fallthru
      _
    %v22 = vld [vmem:[%s0] sm:$0xff]
    %v23 = vld [vmem:[%s0 + $0x8] sm:$0xff]
    %v24 = vld [vmem:[%s2] sm:$0xff]
    %vm25 = vcmask 261120
    %v26 = vsel %vm25, %v22, 0.0
    %27 = vadd.xlane.f32.xlu0 %v26
    %v28 = vpop.xlane.xlu0 %27
    %v29 = vsel %vm25, %v23, 0.0
    %30 = vadd.xlane.f32.xlu0 %v29
    %v31 = vpop.xlane.xlu0 %30
    %v32 = vrcp.pop 32.0
    %v33 = vmul.f32 %v28, %v32
    %v34 = vmul.f32 %v31, %v32
    %v35 = vsub.f32 %v22, %v33
    %v36 = vsub.f32 %v23, %v34
    %v37 = vmul.f32 %v35, %v35
    %v38 = vmul.f32 %v36, %v36
    %v39 = vsel %vm25, %v37, 0.0
    %40 = vadd.xlane.f32.xlu0 %v39
    %v41 = vpop.xlane.xlu0 %40
    %v42 = vsel %vm25, %v38, 0.0
    %43 = vadd.xlane.f32.xlu0 %v42
    %v44 = vpop.xlane.xlu0 %43
    %v45 = vmul.f32 %v41, %v32
    %v46 = vmul.f32 %v44, %v32
    %v47 = vadd.f32 %v45, 1e-05
    %v48 = vadd.f32 %v46, 1e-05
    %v49 = vrsqrt.pop %v47
    %v50 = vrsqrt.pop %v48
    %v51 = vmul.f32 %v35, %v49
    %v52 = vmul.f32 %v36, %v50
    %v53 = vlaneseq
    %v54 = vshrl.u32 %v53, 7
    %v55 = vsub.s32 0, %v54
    %v56 = vrot.slane %v24, %v55
    %v57 = vmul.f32 %v51, %v56
    %v58 = vmul.f32 %v52, %v56
    %v59 = vlaneseq
    %v60 = vshrl.u32 %v59, 7
    %v61 = vsub.s32 1, %v60
    %v62 = vrot.slane %v24, %v61
    %v63 = vadd.f32 %v57, %v62
    %v64 = vadd.f32 %v58, %v62
    %v65 = vld [vmem:[%s1] sm:$0xf]
    %v66 = vld [vmem:[%s1 + $0x4] sm:$0xf]
    %v67 = vld [vmem:[%s1 + $0x8] sm:$0xf]
    %v68 = vld [vmem:[%s1 + $0xc] sm:$0xf]
    %v69 = vpack.c.bf16 %v64, %v63
    %v70 = vlaneseq
    %v71 = vshrl.u32 %v70, 7
    %v72 = vsub.s32 4, %v71
    %v73 = vrot.slane %v24, %v72
    %v78 = vunpack.c.l.b16 %v65
    %v79 = vunpack.c.l.b16 %v66
    %v80 = vunpack.c.l.b16 %v67
    %v81 = vunpack.c.l.b16 %v68
    %v82 = vpack.c.b16 %v79, %v78
    %v83 = vpack.c.b16 %v81, %v80
    %v87 = vsel %vm25, %v69, 0
    %89 = vmatprep.subr.bf16.mxu0 0
    %90 = vmatpush1.bf16.msra.mxu0 %v82
    %91 = vmatprep.subr.bf16.mxu0 0
    %92 = vmatpush1.bf16.msra.mxu0 %v83
    %93 = vmatprep.subr.bf16.mxu0 0
    %94 = vmatpush1.bf16.msra.mxu0 0
    %95 = vmatprep.subr.bf16.mxu0 0
    %96 = vmatpush1.bf16.msra.mxu0 0
    %97 = vmatprep.subr.bf16.mxu0 0
    %98 = vmatpush1.bf16.msra.mxu0 0
    %99 = vmatprep.subr.bf16.mxu0 0
    %100 = vmatpush1.bf16.msra.mxu0 0
    %101 = vmatprep.subr.bf16.mxu0 0
    %102 = vmatpush1.bf16.msra.mxu0 0
    %103 = vmatprep.subr.bf16.mxu0 0
    %104 = vmatpush1.bf16.msra.mxu0 0
    %105 = vmatprep.subr.bf16.mxu0 0
    %106 = vmatpush1.bf16.msra.mxu0 0
    %107 = vmatprep.subr.bf16.mxu0 0
    %108 = vmatpush1.bf16.msra.mxu0 0
    %109 = vmatprep.subr.bf16.mxu0 0
    %110 = vmatpush1.bf16.msra.mxu0 0
    %111 = vmatprep.subr.bf16.mxu0 0
    %112 = vmatpush1.bf16.msra.mxu0 0
    %113 = vmatprep.subr.bf16.mxu0 0
    %114 = vmatpush1.bf16.msra.mxu0 0
    %115 = vmatprep.subr.bf16.mxu0 0
    %116 = vmatpush1.bf16.msra.mxu0 0
    %117 = vmatprep.subr.bf16.mxu0 0
    %118 = vmatpush1.bf16.msra.mxu0 0
    %119 = vmatprep.subr.bf16.mxu0 0
    %120 = vmatpush1.bf16.msra.mxu0 0
    %121 = vmatprep.mubr.bf16.mxu0 0
    %122 = vmatmul.mubr.bf16.gmra.mrb[0].mxu0 %v87
    %v123 = vpop.f32.mrb[0].mxu0
    %v124 = vadd.f32 %v73, %v123
    %v125 = vpop.f32.mrb[0].mxu0
    %v126 = vpop.f32.mrb[0].mxu0
    %v127 = vadd.f32 %v73, %v126
    %v128 = vpop.f32.mrb[0].mxu0
    %129 = vdwg.mxu0
    %v130 = vld [vmem:[%s4] sm:$0xff]
    %v131 = vld [vmem:[%s4 + $0x8] sm:$0xff]
    %v132 = vld [vmem:[%s4 + $0x10] sm:$0xff]
    %v133 = vld [vmem:[%s4 + $0x18] sm:$0xff]
    %v134 = vld [vmem:[%s4 + $0x20] sm:$0xff]
    %v135 = vld [vmem:[%s4 + $0x28] sm:$0xff]
    %v136 = vld [vmem:[%s4 + $0x30] sm:$0xff]
    %v137 = vld [vmem:[%s4 + $0x38] sm:$0xff]
    %v138 = vmul.f32 %v124, %v130
    %v139 = vmul.f32 %v127, %v131
    %v140 = vmul.f32 %v124, %v132
    %v141 = vmul.f32 %v127, %v133
    %v142 = vmul.f32 %v124, %v134
    %v143 = vmul.f32 %v127, %v135
    %v144 = vmul.f32 %v124, %v136
    %v145 = vmul.f32 %v127, %v137
    %v146 = vpack.c.bf16 %v139, %v138
    %v147 = vpack.c.bf16 %v141, %v140
    %v148 = vpack.c.bf16 %v143, %v142
    %v149 = vpack.c.bf16 %v145, %v144
    %v150 = vpack.c.bf16 %v127, %v124
    %v151 = vld [vmem:[%s3] sm:$0xff]
    %v152 = vld [vmem:[%s3 + $0x8] sm:$0xff]
    %v153 = vld [vmem:[%s3 + $0x10] sm:$0xff]
    %v154 = vld [vmem:[%s3 + $0x18] sm:$0xff]
    %v155 = vld [vmem:[%s3 + $0x20] sm:$0xff]
    %v156 = vld [vmem:[%s3 + $0x28] sm:$0xff]
    %v157 = vld [vmem:[%s3 + $0x30] sm:$0xff]
    %v158 = vld [vmem:[%s3 + $0x38] sm:$0xff]
    %160 = vrot.lane.b32.xlu0 %v150, 96
    %v161 = vpop.permute.xlu0 %160
    %v163 = vsel %vm25, %v146, 0
    %v166 = vsel %vm25, %v147, 0
    %v169 = vsel %vm25, %v148, 0
    %v172 = vsel %vm25, %v149, 0
    %v175 = vsel %vm25, %v161, 0
    %177 = vmatprep.subr.bf16.mxu0 0
    %178 = vmatpush1.bf16.xpose.msra.mxu0 %v175
    %179 = vmatprep.subr.bf16.mxu0 0
    %180 = vmatpush1.bf16.xpose.msra.mxu0 0
    %181 = vmatprep.subr.bf16.mxu0 0
    %182 = vmatpush1.bf16.xpose.msra.mxu0 0
    %183 = vmatprep.subr.bf16.mxu0 0
    %184 = vmatpush1.bf16.xpose.msra.mxu0 0
    %185 = vmatprep.subr.bf16.mxu0 0
    %186 = vmatpush1.bf16.xpose.msra.mxu0 0
    %187 = vmatprep.subr.bf16.mxu0 0
    %188 = vmatpush1.bf16.xpose.msra.mxu0 0
    %189 = vmatprep.subr.bf16.mxu0 0
    %190 = vmatpush1.bf16.xpose.msra.mxu0 0
    %191 = vmatprep.subr.bf16.mxu0 0
    %192 = vmatpush1.bf16.xpose.msra.mxu0 0
    %193 = vmatprep.subr.bf16.mxu0 0
    %194 = vmatpush1.bf16.xpose.msra.mxu0 0
    %195 = vmatprep.subr.bf16.mxu0 0
    %196 = vmatpush1.bf16.xpose.msra.mxu0 0
    %197 = vmatprep.subr.bf16.mxu0 0
    %198 = vmatpush1.bf16.xpose.msra.mxu0 0
    %199 = vmatprep.subr.bf16.mxu0 0
    %200 = vmatpush1.bf16.xpose.msra.mxu0 0
    %201 = vmatprep.subr.bf16.mxu0 0
    %202 = vmatpush1.bf16.xpose.msra.mxu0 0
    %203 = vmatprep.subr.bf16.mxu0 0
    %204 = vmatpush1.bf16.xpose.msra.mxu0 0
    %205 = vmatprep.subr.bf16.mxu0 0
    %206 = vmatpush1.bf16.xpose.msra.mxu0 0
    %207 = vmatprep.subr.bf16.mxu0 0
    %208 = vmatpush1.bf16.xpose.msra.mxu0 0
    %209 = vmatprep.mubr.bf16.mxu0 0
    %210 = vmatmul.mubr.bf16.gmra.mrb[0].mxu0 %v163
    %v211 = vpop.f32.mrb[0].mxu0
    %v212 = vadd.f32 %v151, %v211
    %v213 = vpop.f32.mrb[0].mxu0
    %v214 = vpop.f32.mrb[0].mxu0
    %v215 = vadd.f32 %v152, %v214
    %v216 = vpop.f32.mrb[0].mxu0
    %217 = vmatprep.mubr.bf16.mxu0 0
    %218 = vmatmul.mubr.bf16.gmra.mrb[0].mxu0 %v166
    %v219 = vpop.f32.mrb[0].mxu0
    %v220 = vadd.f32 %v153, %v219
    %v221 = vpop.f32.mrb[0].mxu0
    %v222 = vpop.f32.mrb[0].mxu0
    %v223 = vadd.f32 %v154, %v222
    %v224 = vpop.f32.mrb[0].mxu0
    %225 = vmatprep.mubr.bf16.mxu0 0
    %226 = vmatmul.mubr.bf16.gmra.mrb[0].mxu0 %v169
    %v227 = vpop.f32.mrb[0].mxu0
    %v228 = vadd.f32 %v155, %v227
    %v229 = vpop.f32.mrb[0].mxu0
    %v230 = vpop.f32.mrb[0].mxu0
    %v231 = vadd.f32 %v156, %v230
    %v232 = vpop.f32.mrb[0].mxu0
    %233 = vmatprep.mubr.bf16.mxu0 0
    %234 = vmatmul.mubr.bf16.gmra.mrb[0].mxu0 %v172
    %v235 = vpop.f32.mrb[0].mxu0
    %v236 = vadd.f32 %v157, %v235
    %v237 = vpop.f32.mrb[0].mxu0
    %v238 = vpop.f32.mrb[0].mxu0
    %v239 = vadd.f32 %v158, %v238
    %v240 = vpop.f32.mrb[0].mxu0
    %241 = vdwg.mxu0
    %vm242 = vcmask 130048
    %v243 = vsel %vm242, %v212, -inf
    %244 = vmax.xlane.f32.xlu0 %v243
    %v245 = vpop.xlane.xlu0 %244
    %v246 = vsel %vm242, %v215, -inf
    %247 = vmax.xlane.f32.xlu0 %v246
    %v248 = vpop.xlane.xlu0 %247
    %v249 = vsel %vm242, %v220, -inf
    %250 = vmax.xlane.f32.xlu0 %v249
    %v251 = vpop.xlane.xlu0 %250
    %v252 = vsel %vm242, %v223, -inf
    %253 = vmax.xlane.f32.xlu0 %v252
    %v254 = vpop.xlane.xlu0 %253
    %v255 = vsel %vm242, %v228, -inf
    %256 = vmax.xlane.f32.xlu0 %v255
    %v257 = vpop.xlane.xlu0 %256
    %v258 = vsel %vm242, %v231, -inf
    %259 = vmax.xlane.f32.xlu0 %v258
    %v260 = vpop.xlane.xlu0 %259
    %v261 = vsel %vm242, %v236, -inf
    %262 = vmax.xlane.f32.xlu0 %v261
    %v263 = vpop.xlane.xlu0 %262
    %v264 = vsel %vm242, %v239, -inf
    %265 = vmax.xlane.f32.xlu0 %v264
    %v266 = vpop.xlane.xlu0 %265
    %v267 = vsub.f32 %v212, %v245
    %v268 = vsub.f32 %v215, %v248
    %v269 = vsub.f32 %v220, %v251
    %v270 = vsub.f32 %v223, %v254
    %v271 = vsub.f32 %v228, %v257
    %v272 = vsub.f32 %v231, %v260
    %v273 = vsub.f32 %v236, %v263
    %v274 = vsub.f32 %v239, %v266
    %v275 = vmul.f32 %v267, 1.442695
    %v276 = vpow.pop %v275
    %v277 = vmul.f32 %v268, 1.442695
    %v278 = vpow.pop %v277
    %v279 = vmul.f32 %v269, 1.442695
    %v280 = vpow.pop %v279
    %v281 = vmul.f32 %v270, 1.442695
    %v282 = vpow.pop %v281
    %v283 = vmul.f32 %v271, 1.442695
    %v284 = vpow.pop %v283
    %v285 = vmul.f32 %v272, 1.442695
    %v286 = vpow.pop %v285
    %v287 = vmul.f32 %v273, 1.442695
    %v288 = vpow.pop %v287
    %v289 = vmul.f32 %v274, 1.442695
    %v290 = vpow.pop %v289
    %v291 = vsel %vm242, %v276, 0.0
    %292 = vadd.xlane.f32.xlu0 %v291
    %v293 = vpop.xlane.xlu0 %292
    %v294 = vsel %vm242, %v278, 0.0
    %295 = vadd.xlane.f32.xlu0 %v294
    %v296 = vpop.xlane.xlu0 %295
    %v297 = vsel %vm242, %v280, 0.0
    %298 = vadd.xlane.f32.xlu0 %v297
    %v299 = vpop.xlane.xlu0 %298
    %v300 = vsel %vm242, %v282, 0.0
    %301 = vadd.xlane.f32.xlu0 %v300
    %v302 = vpop.xlane.xlu0 %301
    %v303 = vsel %vm242, %v284, 0.0
    %304 = vadd.xlane.f32.xlu0 %v303
    %v305 = vpop.xlane.xlu0 %304
    %v306 = vsel %vm242, %v286, 0.0
    %307 = vadd.xlane.f32.xlu0 %v306
    %v308 = vpop.xlane.xlu0 %307
    %v309 = vsel %vm242, %v288, 0.0
    %310 = vadd.xlane.f32.xlu0 %v309
    %v311 = vpop.xlane.xlu0 %310
    %v312 = vsel %vm242, %v290, 0.0
    %313 = vadd.xlane.f32.xlu0 %v312
    %v314 = vpop.xlane.xlu0 %313
    %v315 = vrcp.pop %v293
    %v316 = vrcp.pop %v296
    %v317 = vrcp.pop %v299
    %v318 = vrcp.pop %v302
    %v319 = vrcp.pop %v305
    %v320 = vrcp.pop %v308
    %v321 = vrcp.pop %v311
    %v322 = vrcp.pop %v314
    %v323 = vmul.f32 %v276, %v315
    %v324 = vmul.f32 %v278, %v316
    %v325 = vmul.f32 %v280, %v317
    %v326 = vmul.f32 %v282, %v318
    %v327 = vmul.f32 %v284, %v319
    %v328 = vmul.f32 %v286, %v320
    %v329 = vmul.f32 %v288, %v321
    %v330 = vmul.f32 %v290, %v322
    %v331 = vpack.c.bf16 %v324, %v323
    %v332 = vpack.c.bf16 %v326, %v325
    %v333 = vpack.c.bf16 %v328, %v327
    %v334 = vpack.c.bf16 %v330, %v329
    %335 = vrot.lane.b32.xlu0 %v150, 64
    %v336 = vpop.permute.xlu0 %335
    %v339 = vsel %vm242, %v331, 0
    %v342 = vsel %vm242, %v332, 0
    %v345 = vsel %vm242, %v333, 0
    %v348 = vsel %vm242, %v334, 0
    %350 = vmatprep.subr.bf16.mxu0 0
    %351 = vmatpush1.bf16.msra.mxu0 %v336
    %352 = vmatprep.subr.bf16.mxu0 0
    %353 = vmatpush1.bf16.msra.mxu0 0
    %354 = vmatprep.subr.bf16.mxu0 0
    %355 = vmatpush1.bf16.msra.mxu0 0
    %356 = vmatprep.subr.bf16.mxu0 0
    %357 = vmatpush1.bf16.msra.mxu0 0
    %358 = vmatprep.subr.bf16.mxu0 0
    %359 = vmatpush1.bf16.msra.mxu0 0
    %360 = vmatprep.subr.bf16.mxu0 0
    %361 = vmatpush1.bf16.msra.mxu0 0
    %362 = vmatprep.subr.bf16.mxu0 0
    %363 = vmatpush1.bf16.msra.mxu0 0
    %364 = vmatprep.subr.bf16.mxu0 0
    %365 = vmatpush1.bf16.msra.mxu0 0
    %366 = vmatprep.subr.bf16.mxu0 0
    %367 = vmatpush1.bf16.msra.mxu0 0
    %368 = vmatprep.subr.bf16.mxu0 0
    %369 = vmatpush1.bf16.msra.mxu0 0
    %370 = vmatprep.subr.bf16.mxu0 0
    %371 = vmatpush1.bf16.msra.mxu0 0
    %372 = vmatprep.subr.bf16.mxu0 0
    %373 = vmatpush1.bf16.msra.mxu0 0
    %374 = vmatprep.subr.bf16.mxu0 0
    %375 = vmatpush1.bf16.msra.mxu0 0
    %376 = vmatprep.subr.bf16.mxu0 0
    %377 = vmatpush1.bf16.msra.mxu0 0
    %378 = vmatprep.subr.bf16.mxu0 0
    %379 = vmatpush1.bf16.msra.mxu0 0
    %380 = vmatprep.subr.bf16.mxu0 0
    %381 = vmatpush1.bf16.msra.mxu0 0
    %382 = vmatprep.mubr.bf16.mxu0 0
    %383 = vmatmul.mubr.bf16.gmra.mrb[0].mxu0 %v339
    %v384 = vpop.f32.mrb[0].mxu0
    %v385 = vadd.f32 0.0, %v384
    %v386 = vpop.f32.mrb[0].mxu0
    %v387 = vpop.f32.mrb[0].mxu0
    %v388 = vadd.f32 0.0, %v387
    %v389 = vpop.f32.mrb[0].mxu0
    %390 = vmatprep.mubr.bf16.mxu0 0
    %391 = vmatmul.mubr.bf16.gmra.mrb[0].mxu0 %v342
    %v392 = vpop.f32.mrb[0].mxu0
    %v393 = vadd.f32 0.0, %v392
    %v394 = vpop.f32.mrb[0].mxu0
    %v395 = vpop.f32.mrb[0].mxu0
    %v396 = vadd.f32 0.0, %v395
    %v397 = vpop.f32.mrb[0].mxu0
    %398 = vmatprep.mubr.bf16.mxu0 0
    %399 = vmatmul.mubr.bf16.gmra.mrb[0].mxu0 %v345
    %v400 = vpop.f32.mrb[0].mxu0
    %v401 = vadd.f32 0.0, %v400
    %v402 = vpop.f32.mrb[0].mxu0
    %v403 = vpop.f32.mrb[0].mxu0
    %v404 = vadd.f32 0.0, %v403
    %v405 = vpop.f32.mrb[0].mxu0
    %406 = vmatprep.mubr.bf16.mxu0 0
    %407 = vmatmul.mubr.bf16.gmra.mrb[0].mxu0 %v348
    %v408 = vpop.f32.mrb[0].mxu0
    %v409 = vadd.f32 0.0, %v408
    %v410 = vpop.f32.mrb[0].mxu0
    %v411 = vpop.f32.mrb[0].mxu0
    %v412 = vadd.f32 0.0, %v411
    %v413 = vpop.f32.mrb[0].mxu0
    %414 = vdwg.mxu0
    %v415 = vmul.f32 %v385, %v130
    %v416 = vmul.f32 %v388, %v131
    %v417 = vmul.f32 %v393, %v132
    %v418 = vmul.f32 %v396, %v133
    %v419 = vmul.f32 %v401, %v134
    %v420 = vmul.f32 %v404, %v135
    %v421 = vmul.f32 %v409, %v136
    %v422 = vmul.f32 %v412, %v137
    %v423 = vadd.f32 %v415, %v417
    %v424 = vadd.f32 %v416, %v418
    %v425 = vadd.f32 %v423, %v419
    %v426 = vadd.f32 %v424, %v420
    %v427 = vadd.f32 %v425, %v421
    %v428 = vadd.f32 %v426, %v422
    %v429 = vld [vmem:[%s1 + $0x10] sm:$0xf]
    %v430 = vld [vmem:[%s1 + $0x14] sm:$0xf]
    %v431 = vld [vmem:[%s1 + $0x18] sm:$0xf]
    %v432 = vld [vmem:[%s1 + $0x1c] sm:$0xf]
    %v433 = vpack.c.bf16 %v428, %v427
    %v434 = vlaneseq
    %v435 = vshrl.u32 %v434, 7
    %v436 = vsub.s32 5, %v435
    %v437 = vrot.slane %v24, %v436
    %v442 = vunpack.c.l.b16 %v429
    %v443 = vunpack.c.l.b16 %v430
    %v444 = vunpack.c.l.b16 %v431
    %v445 = vunpack.c.l.b16 %v432
    %v446 = vpack.c.b16 %v443, %v442
    %v447 = vpack.c.b16 %v445, %v444
    %v451 = vsel %vm25, %v433, 0
    %453 = vmatprep.subr.bf16.mxu0 0
    %454 = vmatpush1.bf16.msra.mxu0 %v446
    %455 = vmatprep.subr.bf16.mxu0 0
    %456 = vmatpush1.bf16.msra.mxu0 %v447
    %457 = vmatprep.subr.bf16.mxu0 0
    %458 = vmatpush1.bf16.msra.mxu0 0
    %459 = vmatprep.subr.bf16.mxu0 0
    %460 = vmatpush1.bf16.msra.mxu0 0
    %461 = vmatprep.subr.bf16.mxu0 0
    %462 = vmatpush1.bf16.msra.mxu0 0
    %463 = vmatprep.subr.bf16.mxu0 0
    %464 = vmatpush1.bf16.msra.mxu0 0
    %465 = vmatprep.subr.bf16.mxu0 0
    %466 = vmatpush1.bf16.msra.mxu0 0
    %467 = vmatprep.subr.bf16.mxu0 0
    %468 = vmatpush1.bf16.msra.mxu0 0
    %469 = vmatprep.subr.bf16.mxu0 0
    %470 = vmatpush1.bf16.msra.mxu0 0
    %471 = vmatprep.subr.bf16.mxu0 0
    %472 = vmatpush1.bf16.msra.mxu0 0
    %473 = vmatprep.subr.bf16.mxu0 0
    %474 = vmatpush1.bf16.msra.mxu0 0
    %475 = vmatprep.subr.bf16.mxu0 0
    %476 = vmatpush1.bf16.msra.mxu0 0
    %477 = vmatprep.subr.bf16.mxu0 0
    %478 = vmatpush1.bf16.msra.mxu0 0
    %479 = vmatprep.subr.bf16.mxu0 0
    %480 = vmatpush1.bf16.msra.mxu0 0
    %481 = vmatprep.subr.bf16.mxu0 0
    %482 = vmatpush1.bf16.msra.mxu0 0
    %483 = vmatprep.subr.bf16.mxu0 0
    %484 = vmatpush1.bf16.msra.mxu0 0
    %485 = vmatprep.mubr.bf16.mxu0 0
    %486 = vmatmul.mubr.bf16.gmra.mrb[0].mxu0 %v451
    %v487 = vpop.f32.mrb[0].mxu0
    %v488 = vadd.f32 %v437, %v487
    %v489 = vpop.f32.mrb[0].mxu0
    %v490 = vpop.f32.mrb[0].mxu0
    %v491 = vadd.f32 %v437, %v490
    %v492 = vpop.f32.mrb[0].mxu0
    %493 = vdwg.mxu0
    %v494 = vadd.f32 %v22, %v488
    %v495 = vadd.f32 %v23, %v491
    %v496 = vsel %vm25, %v494, 0.0
    %497 = vadd.xlane.f32.xlu0 %v496
    %v498 = vpop.xlane.xlu0 %497
    %v499 = vsel %vm25, %v495, 0.0
    %500 = vadd.xlane.f32.xlu0 %v499
    %v501 = vpop.xlane.xlu0 %500
    %v502 = vmul.f32 %v498, %v32
    %v503 = vmul.f32 %v501, %v32
    %v504 = vsub.f32 %v494, %v502
    %v505 = vsub.f32 %v495, %v503
    %v506 = vmul.f32 %v504, %v504
    %v507 = vmul.f32 %v505, %v505
    %v508 = vsel %vm25, %v506, 0.0
    %509 = vadd.xlane.f32.xlu0 %v508
    %v510 = vpop.xlane.xlu0 %509
    %v511 = vsel %vm25, %v507, 0.0
    %512 = vadd.xlane.f32.xlu0 %v511
    %v513 = vpop.xlane.xlu0 %512
    %v514 = vmul.f32 %v510, %v32
    %v515 = vmul.f32 %v513, %v32
    %v516 = vadd.f32 %v514, 1e-05
    %v517 = vadd.f32 %v515, 1e-05
    %v518 = vrsqrt.pop %v516
    %v519 = vrsqrt.pop %v517
    %v520 = vmul.f32 %v504, %v518
    %v521 = vmul.f32 %v505, %v519
    %v522 = vlaneseq
    %v523 = vshrl.u32 %v522, 7
    %v524 = vsub.s32 2, %v523
    %v525 = vrot.slane %v24, %v524
    %v526 = vmul.f32 %v520, %v525
    %v527 = vmul.f32 %v521, %v525
    %v528 = vlaneseq
    %v529 = vshrl.u32 %v528, 7
    %v530 = vsub.s32 3, %v529
    %v531 = vrot.slane %v24, %v530
    %v532 = vadd.f32 %v526, %v531
    %v533 = vadd.f32 %v527, %v531
    %v534 = vld [vmem:[%s1 + $0x20] sm:$0xf]
    %v535 = vld [vmem:[%s1 + $0x24] sm:$0xf]
    %v536 = vld [vmem:[%s1 + $0x28] sm:$0xf]
    %v537 = vld [vmem:[%s1 + $0x2c] sm:$0xf]
    %v538 = vpack.c.bf16 %v533, %v532
    %v539 = vlaneseq
    %v540 = vshrl.u32 %v539, 7
    %v541 = vsub.s32 6, %v540
    %v542 = vrot.slane %v24, %v541
    %v547 = vunpack.c.l.b16 %v534
    %v548 = vunpack.c.l.b16 %v535
    %v549 = vunpack.c.l.b16 %v536
    %v550 = vunpack.c.l.b16 %v537
    %v551 = vpack.c.b16 %v548, %v547
    %v552 = vpack.c.b16 %v550, %v549
    %v556 = vsel %vm25, %v538, 0
    %558 = vmatprep.subr.bf16.mxu0 0
    %559 = vmatpush1.bf16.msra.mxu0 %v551
    %560 = vmatprep.subr.bf16.mxu0 0
    %561 = vmatpush1.bf16.msra.mxu0 %v552
    %562 = vmatprep.subr.bf16.mxu0 0
    %563 = vmatpush1.bf16.msra.mxu0 0
    %564 = vmatprep.subr.bf16.mxu0 0
    %565 = vmatpush1.bf16.msra.mxu0 0
    %566 = vmatprep.subr.bf16.mxu0 0
    %567 = vmatpush1.bf16.msra.mxu0 0
    %568 = vmatprep.subr.bf16.mxu0 0
    %569 = vmatpush1.bf16.msra.mxu0 0
    %570 = vmatprep.subr.bf16.mxu0 0
    %571 = vmatpush1.bf16.msra.mxu0 0
    %572 = vmatprep.subr.bf16.mxu0 0
    %573 = vmatpush1.bf16.msra.mxu0 0
    %574 = vmatprep.subr.bf16.mxu0 0
    %575 = vmatpush1.bf16.msra.mxu0 0
    %576 = vmatprep.subr.bf16.mxu0 0
    %577 = vmatpush1.bf16.msra.mxu0 0
    %578 = vmatprep.subr.bf16.mxu0 0
    %579 = vmatpush1.bf16.msra.mxu0 0
    %580 = vmatprep.subr.bf16.mxu0 0
    %581 = vmatpush1.bf16.msra.mxu0 0
    %582 = vmatprep.subr.bf16.mxu0 0
    %583 = vmatpush1.bf16.msra.mxu0 0
    %584 = vmatprep.subr.bf16.mxu0 0
    %585 = vmatpush1.bf16.msra.mxu0 0
    %586 = vmatprep.subr.bf16.mxu0 0
    %587 = vmatpush1.bf16.msra.mxu0 0
    %588 = vmatprep.subr.bf16.mxu0 0
    %589 = vmatpush1.bf16.msra.mxu0 0
    %590 = vmatprep.mubr.bf16.mxu0 0
    %591 = vmatmul.mubr.bf16.gmra.mrb[0].mxu0 %v556
    %v592 = vpop.f32.mrb[0].mxu0
    %v593 = vadd.f32 %v542, %v592
    %v594 = vpop.f32.mrb[0].mxu0
    %v595 = vpop.f32.mrb[0].mxu0
    %v596 = vadd.f32 %v542, %v595
    %v597 = vpop.f32.mrb[0].mxu0
    %598 = vdwg.mxu0
    %v599 = vmul.f32 %v593, 0.5
    %v600 = vmul.f32 %v596, 0.5
    %v601 = vmul.f32 %v593, 0.044715
    %v602 = vmul.f32 %v596, 0.044715
    %v603 = vmul.f32 %v601, %v593
    %v604 = vmul.f32 %v602, %v596
    %v605 = vmul.f32 %v603, %v593
    %v606 = vmul.f32 %v604, %v596
    %v607 = vadd.f32 %v593, %v605
    %v608 = vadd.f32 %v596, %v606
    %v609 = vmul.f32 %v607, 0.7978846
    %v610 = vmul.f32 %v608, 0.7978846
    %v611 = vtanh.pop %v609
    %v612 = vtanh.pop %v610
    %v613 = vadd.f32 %v611, 1.0
    %v614 = vadd.f32 %v612, 1.0
    %v615 = vmul.f32 %v599, %v613
    %v616 = vmul.f32 %v600, %v614
    %v617 = vld [vmem:[%s1 + $0x30] sm:$0xf]
    %v618 = vld [vmem:[%s1 + $0x34] sm:$0xf]
    %v619 = vld [vmem:[%s1 + $0x38] sm:$0xf]
    %v620 = vld [vmem:[%s1 + $0x3c] sm:$0xf]
    %v621 = vld [vmem:[%s1 + $0x40] sm:$0xf]
    %v622 = vld [vmem:[%s1 + $0x44] sm:$0xf]
    %v623 = vld [vmem:[%s1 + $0x48] sm:$0xf]
    %v624 = vld [vmem:[%s1 + $0x4c] sm:$0xf]
    %v625 = vld [vmem:[%s1 + $0x50] sm:$0xf]
    %v626 = vld [vmem:[%s1 + $0x54] sm:$0xf]
    %v627 = vld [vmem:[%s1 + $0x58] sm:$0xf]
    %v628 = vld [vmem:[%s1 + $0x5c] sm:$0xf]
    %v629 = vld [vmem:[%s1 + $0x60] sm:$0xf]
    %v630 = vld [vmem:[%s1 + $0x64] sm:$0xf]
    %v631 = vld [vmem:[%s1 + $0x68] sm:$0xf]
    %v632 = vld [vmem:[%s1 + $0x6c] sm:$0xf]
    %v633 = vpack.c.bf16 %v616, %v615
    %v634 = vlaneseq
    %v635 = vshrl.u32 %v634, 7
    %v636 = vsub.s32 7, %v635
    %v637 = vrot.slane %v24, %v636
    %v654 = vunpack.c.l.b16 %v617
    %v655 = vunpack.c.l.b16 %v618
    %v656 = vunpack.c.l.b16 %v619
    %v657 = vunpack.c.l.b16 %v620
    %v658 = vunpack.c.l.b16 %v621
    %v659 = vunpack.c.l.b16 %v622
    %v660 = vunpack.c.l.b16 %v623
    %v661 = vunpack.c.l.b16 %v624
    %v662 = vunpack.c.l.b16 %v625
    %v663 = vunpack.c.l.b16 %v626
    %v664 = vunpack.c.l.b16 %v627
    %v665 = vunpack.c.l.b16 %v628
    %v666 = vunpack.c.l.b16 %v629
    %v667 = vunpack.c.l.b16 %v630
    %v668 = vunpack.c.l.b16 %v631
    %v669 = vunpack.c.l.b16 %v632
    %v670 = vpack.c.b16 %v655, %v654
    %v671 = vpack.c.b16 %v657, %v656
    %v672 = vpack.c.b16 %v659, %v658
    %v673 = vpack.c.b16 %v661, %v660
    %v674 = vpack.c.b16 %v663, %v662
    %v675 = vpack.c.b16 %v665, %v664
    %v676 = vpack.c.b16 %v667, %v666
    %v677 = vpack.c.b16 %v669, %v668
    %686 = vmatprep.subr.bf16.mxu0 0
    %687 = vmatpush1.bf16.msra.mxu0 %v670
    %688 = vmatprep.subr.bf16.mxu0 0
    %689 = vmatpush1.bf16.msra.mxu0 %v671
    %690 = vmatprep.subr.bf16.mxu0 0
    %691 = vmatpush1.bf16.msra.mxu0 %v672
    %692 = vmatprep.subr.bf16.mxu0 0
    %693 = vmatpush1.bf16.msra.mxu0 %v673
    %694 = vmatprep.subr.bf16.mxu0 0
    %695 = vmatpush1.bf16.msra.mxu0 %v674
    %696 = vmatprep.subr.bf16.mxu0 0
    %697 = vmatpush1.bf16.msra.mxu0 %v675
    %698 = vmatprep.subr.bf16.mxu0 0
    %699 = vmatpush1.bf16.msra.mxu0 %v676
    %700 = vmatprep.subr.bf16.mxu0 0
    %701 = vmatpush1.bf16.msra.mxu0 %v677
    %702 = vmatprep.subr.bf16.mxu0 0
    %703 = vmatpush1.bf16.msra.mxu0 0
    %704 = vmatprep.subr.bf16.mxu0 0
    %705 = vmatpush1.bf16.msra.mxu0 0
    %706 = vmatprep.subr.bf16.mxu0 0
    %707 = vmatpush1.bf16.msra.mxu0 0
    %708 = vmatprep.subr.bf16.mxu0 0
    %709 = vmatpush1.bf16.msra.mxu0 0
    %710 = vmatprep.subr.bf16.mxu0 0
    %711 = vmatpush1.bf16.msra.mxu0 0
    %712 = vmatprep.subr.bf16.mxu0 0
    %713 = vmatpush1.bf16.msra.mxu0 0
    %714 = vmatprep.subr.bf16.mxu0 0
    %715 = vmatpush1.bf16.msra.mxu0 0
    %716 = vmatprep.subr.bf16.mxu0 0
    %717 = vmatpush1.bf16.msra.mxu0 0
    %718 = vmatprep.mubr.bf16.mxu0 0
    %719 = vmatmul.mubr.bf16.gmra.mrb[0].mxu0 %v633
    %v720 = vpop.f32.mrb[0].mxu0
    %v721 = vadd.f32 %v637, %v720
    %v722 = vpop.f32.mrb[0].mxu0
    %v723 = vpop.f32.mrb[0].mxu0
    %v724 = vadd.f32 %v637, %v723
    %v725 = vpop.f32.mrb[0].mxu0
    %726 = vdwg.mxu0
    %v727 = vadd.f32 %v494, %v721
    %v728 = vadd.f32 %v495, %v724
    %729 = vst.msk [vmem:[#allocation2] sm:$0xff] %vm25, %v727
    %730 = vst.msk [vmem:[#allocation2 + $0x8] sm:$0xff] %vm25, %v728
    // Predicated region
    $region22: #{_transformer_block.1} parent=1 // pred_check
      _
    $region23: #{_transformer_block.1} parent=1 // pred_check_branch
      %732 = sbr.rel (0) target = $region25
    $region24: #{_transformer_block.1} parent=1 // pred_region
      %s734 = ssub.s32 256, 256
      %735 = vsyncadd [#allocation3], %s734
      %s736 = sshll.u32 [#allocation2], 4
      %s737 = int_to_ptr.vmem [resolvable:$true] %s736
      %742 = dma.vmem_to_hbm [thread:$0]  %s737, 256, %s5, [#allocation3], 128, 128, 8
    $region25: #{_transformer_block.1} parent=1 // pred_fallthru
      _
    // Predicated region
    $region26: #{_transformer_block.1} parent=1 // pred_check
      _
    $region27: #{_transformer_block.1} parent=1 // pred_check_branch
      %744 = sbr.rel (0) target = $region29
    $region28: #{_transformer_block.1} parent=1 // pred_region
      %745 = dma.done [#allocation3], 256
    $region29: #{_transformer_block.1} parent=1 // pred_fallthru
      _
    %746 = vsyncpa [#allocation3], 1

</llo_original>
